<compile_context>
chip_gen: v7x
topology: tpu7x:2x2x1
jax: 0.10.0
libtpu: 0.0.40
codegen_flags: <defaults>
</compile_context>

<pallas_src>
import functools

import jax
import jax.numpy as jnp
from jax.experimental import pallas as pl
from jax.experimental.pallas import tpu as pltpu

_LANE = 128


def _round_up(x, m):
    return (x + m - 1) // m * m


def _gelu_tanh(x):
    # GELU with tanh approximation (matches nn.GELU(approximate='tanh'))
    c = jnp.float32(0.7978845608028654)  # sqrt(2/pi)
    return 0.5 * x * (1.0 + jnp.tanh(c * (x + 0.044715 * x * x * x)))


def _layer_norm(x, gamma, beta, eps=1e-5):
    # Unpadded reference LayerNorm (PyTorch default eps=1e-5).
    mean = jnp.mean(x, axis=-1, keepdims=True)
    var = jnp.mean(jnp.square(x - mean), axis=-1, keepdims=True)
    inv = jax.lax.rsqrt(var + eps)
    return (x - mean) * inv * gamma + beta


def _layer_norm_masked(h, gamma, beta, mask, inv_n, eps=1e-5):
    # `h` has exact zeros in the padded lanes, so the plain lane-sum divided by
    # the true width gives the correct mean; variance needs the mask so the
    # padded (0 - mean) terms do not contribute. gamma/beta are zero-padded, so
    # padded lanes come out exactly 0 again.
    mean = jnp.sum(h, axis=-1, keepdims=True) * inv_n
    d = (h - mean) * mask
    var = jnp.sum(d * d, axis=-1, keepdims=True) * inv_n
    inv = jax.lax.rsqrt(var + eps)
    return d * inv * gamma + beta


def vfuncs_kernel(x_ref, w1_ref, w2_ref, vec_ref, out_ref, *, h_true, n_e):
    x = x_ref[...]                          # (TB, obs_pad) bf16
    h_pad = vec_ref.shape[-1]

    lane = jax.lax.broadcasted_iota(jnp.int32, (1, h_pad), 1)
    mask = (lane < h_true).astype(jnp.float32)
    inv_n = jnp.float32(1.0 / h_true)

    # Static unrolled loop over the ensembles held in this block (n_e is small).
    for e in range(n_e):
        vec = vec_ref[e]                    # (8, h_pad) f32: b1,g1,be1,b2,g2,be2,w3col,b3

        # Layer 1: Linear (bf16 x bf16 -> f32 acc) -> masked LayerNorm -> GELU(tanh)
        h = jnp.dot(x, w1_ref[e], preferred_element_type=jnp.float32) + vec[0]
        h = _layer_norm_masked(h, vec[1], vec[2], mask, inv_n)
        h = _gelu_tanh(h)

        # Layer 2: Linear (bf16 x bf16 -> f32 acc) -> masked LayerNorm -> GELU(tanh)
        h = jnp.dot(h.astype(jnp.bfloat16), w2_ref[e],
                    preferred_element_type=jnp.float32) + vec[3]
        h = _layer_norm_masked(h, vec[4], vec[5], mask, inv_n)
        h = _gelu_tanh(h)

        # Head: (1, H) contracted with (TB, H) over H -> (1, TB), written straight
        # into the lane-dense output row (no width-1 masked stores / relayout).
        v = jax.lax.dot_general(vec[6:7, :], h,
                                dimension_numbers=(((1,), (1,)), ((), ())),
                                preferred_element_type=jnp.float32)
        out_ref[pl.ds(e, 1), :] = v + vec[7:8, 0:1]   # add scalar bias b3


def prepare_params(params):
    """One-time padding / packing of the ensemble weights (hoisted out of the
    per-call path). Returns a dict consumed by vfuncs_forward."""
    (w1, b1, g1, be1, w2, b2, g2, be2, w3, b3) = params
    E, obs_dim, H = w1.shape
    obs_pad = _round_up(obs_dim, _LANE)
    h_pad = _round_up(H, _LANE)
    f32, bf16 = jnp.float32, jnp.bfloat16

    # Padded rows/cols MUST stay exactly zero (masked-LayerNorm invariant).
    w1_p = jnp.zeros((E, obs_pad, h_pad), bf16).at[:, :obs_dim, :H].set(w1.astype(bf16))
    w2_p = jnp.zeros((E, h_pad, h_pad), bf16).at[:, :H, :H].set(w2.astype(bf16))

    vec = jnp.zeros((E, 8, h_pad), f32)
    vec = vec.at[:, 0, :H].set(b1.astype(f32))
    vec = vec.at[:, 1, :H].set(g1.astype(f32))
    vec = vec.at[:, 2, :H].set(be1.astype(f32))
    vec = vec.at[:, 3, :H].set(b2.astype(f32))
    vec = vec.at[:, 4, :H].set(g2.astype(f32))
    vec = vec.at[:, 5, :H].set(be2.astype(f32))
    vec = vec.at[:, 6, :H].set(w3[:, :, 0].astype(f32))
    vec = vec.at[:, 7, 0].set(b3[:, 0].astype(f32))

    return dict(w1=w1_p, w2=w2_p, vec=vec, obs_dim=obs_dim, hidden_dim=H,
                n_ensembles=E, obs_pad=obs_pad, h_pad=h_pad)


def vfuncs_forward(obs, prep, *, batch_tile=512, force_fold=None):
    """obs: (B, obs_dim) float32; prep: output of prepare_params.
    Returns (B, E, 1) float32, matching torch.stack([mlp_e(obs)], -2)."""
    f32, bf16 = jnp.float32, jnp.bfloat16
    B, obs_dim = obs.shape
    assert obs_dim == prep["obs_dim"]
    E, H = prep["n_ensembles"], prep["hidden_dim"]
    obs_pad, h_pad = prep["obs_pad"], prep["h_pad"]
    w1_p, w2_p, vec = prep["w1"], prep["w2"], prep["vec"]

    # Batch tiling: 256-aligned lane-dense tiles for large B (v6e/v7x MXU is
    # 256x256); for small B pad only to the next multiple of 16 and use a single
    # full-extent batch block instead of blowing 8 rows up to 128/512.
    tb_target = _round_up(max(batch_tile, _LANE), _LANE)
    if B <= tb_target:
        B_pad = _round_up(B, 16)
        TB = B_pad
    else:
        TB = tb_target
        B_pad = _round_up(B, TB)
    nb = B_pad // TB

    # Per-call work: only the obs activation is padded / cast.
    obs_p = jnp.zeros((B_pad, obs_pad), bf16).at[:B, :obs_dim].set(obs.astype(bf16))

    # Fold the ensemble axis into the block when all ensembles' weights fit
    # comfortably in VMEM: obs is loaded once per batch tile (not E times) and
    # the degenerate (E, 1) grid disappears for the tiny-H/E regime.
    folded_weight_bytes = (E * (obs_pad + h_pad) * h_pad * 2   # bf16 W1 + W2
                           + E * 8 * h_pad * 4)                # f32 vec pack
    fold = folded_weight_bytes <= 16 * 1024 * 1024
    if force_fold is not None:
        fold = bool(force_fold)

    if fold:
        e_blk = E
        grid = (nb,)
        in_specs = [
            pl.BlockSpec((TB, obs_pad), lambda b: (b, 0)),           # obs tile
            pl.BlockSpec((E, obs_pad, h_pad), lambda b: (0, 0, 0)),  # all W1
            pl.BlockSpec((E, h_pad, h_pad), lambda b: (0, 0, 0)),    # all W2
            pl.BlockSpec((E, 8, h_pad), lambda b: (0, 0, 0)),        # vec pack
        ]
        out_specs = pl.BlockSpec((E, TB), lambda b: (0, b))          # lane-dense
        dim_sem = ("parallel",)
    else:
        e_blk = 1
        # Ensemble axis outer -> weight blocks stay resident across batch steps.
        grid = (E, nb)
        in_specs = [
            pl.BlockSpec((TB, obs_pad), lambda e, b: (b, 0)),
            pl.BlockSpec((1, obs_pad, h_pad), lambda e, b: (e, 0, 0)),
            pl.BlockSpec((1, h_pad, h_pad), lambda e, b: (e, 0, 0)),
            pl.BlockSpec((1, 8, h_pad), lambda e, b: (e, 0, 0)),
        ]
        out_specs = pl.BlockSpec((1, TB), lambda e, b: (e, b))
        dim_sem = ("parallel", "parallel")

    # VMEM budget from the actual block sizes (factor 2 = double buffering,
    # counted once), 8 MiB floor for compiler-internal scratch, 48 MiB cap
    # (v7x has 64 MiB physical VMEM per TensorCore).
    block_bytes = (2 * TB * obs_pad * 2               # obs tile (bf16)
                   + 2 * e_blk * obs_pad * h_pad * 2  # W1 (bf16)
                   + 2 * e_blk * h_pad * h_pad * 2    # W2 (bf16)
                   + 2 * e_blk * 8 * h_pad * 4        # vec pack (f32)
                   + 2 * e_blk * TB * 4               # output tile (f32)
                   + 6 * TB * h_pad * 4)              # f32 activation temporaries
    vmem_limit = int(min(max(block_bytes, 8 * 1024 * 1024), 48 * 1024 * 1024))

    out = pl.pallas_call(
        functools.partial(vfuncs_kernel, h_true=H, n_e=e_blk),
        out_shape=jax.ShapeDtypeStruct((E, B_pad), f32),
        grid_spec=pltpu.PrefetchScalarGridSpec(
            num_scalar_prefetch=0,
            grid=grid,
            in_specs=in_specs,
            out_specs=out_specs,
        ),
        compiler_params=pltpu.CompilerParams(
            dimension_semantics=dim_sem,
            vmem_limit_bytes=vmem_limit),
    )(obs_p, w1_p, w2_p, vec)

    # (E, B_pad) -> (B, E, 1), matching torch.stack([...], -2).
    return jnp.transpose(out[:, :B])[:, :, None]


def init_params(key, obs_dim, hidden_dim, n_ensembles):
    """Deterministic synthetic init. Linear weights ~ U(-1/sqrt(fan_in), +),
    LayerNorm gamma=1, beta=0 (PyTorch defaults)."""
    E, H = n_ensembles, hidden_dim
    ks = jax.random.split(key, 6)

    def u(k, shape, fan_in):
        bound = 1.0 / jnp.sqrt(jnp.float32(fan_in))
        return jax.random.uniform(k, shape, jnp.float32, -bound, bound)

    w1 = u(ks[0], (E, obs_dim, H), obs_dim)
    b1 = u(ks[1], (E, H), obs_dim)
    w2 = u(ks[2], (E, H, H), H)
    b2 = u(ks[3], (E, H), H)
    w3 = u(ks[4], (E, H, 1), H)
    b3 = u(ks[5], (E, 1), H)
    g1 = jnp.ones((E, H), jnp.float32)
    be1 = jnp.zeros((E, H), jnp.float32)
    g2 = jnp.ones((E, H), jnp.float32)
    be2 = jnp.zeros((E, H), jnp.float32)
    return (w1, b1, g1, be1, w2, b2, g2, be2, w3, b3)


def vfuncs_reference(obs, params):
    """Pure-JAX f32 reference for sanity checking."""
    (w1, b1, g1, be1, w2, b2, g2, be2, w3, b3) = params
    E = w1.shape[0]
    outs = []
    for e in range(E):
        h = obs @ w1[e] + b1[e]
        h = _layer_norm(h, g1[e], be1[e])
        h = _gelu_tanh(h)
        h = h @ w2[e] + b2[e]
        h = _layer_norm(h, g2[e], be2[e])
        h = _gelu_tanh(h)
        outs.append(h @ w3[e] + b3[e])
    return jnp.stack(outs, axis=-2)  # (B, E, 1)


def vfuncs_reference_bf16(obs, params):
    """Pure-JAX reference mirroring the kernel's bf16 matmul operands
    (f32 accumulation, f32 LayerNorm / GELU / head)."""
    (w1, b1, g1, be1, w2, b2, g2, be2, w3, b3) = params
    E = w1.shape[0]
    bf16, f32 = jnp.bfloat16, jnp.float32
    x = obs.astype(bf16)
    outs = []
    for e in range(E):
        h = jnp.dot(x, w1[e].astype(bf16), preferred_element_type=f32) + b1[e]
        h = _layer_norm(h, g1[e], be1[e])
        h = _gelu_tanh(h)
        h = jnp.dot(h.astype(bf16), w2[e].astype(bf16),
                    preferred_element_type=f32) + b2[e]
        h = _layer_norm(h, g2[e], be2[e])
        h = _gelu_tanh(h)
        outs.append(h @ w3[e] + b3[e])
    return jnp.stack(outs, axis=-2)  # (B, E, 1)


if __name__ == "__main__":
    key = jax.random.PRNGKey(0)
    k_obs, k_par = jax.random.split(key)

    B, obs_dim, hidden_dim, n_ensembles = 8, 16, 32, 2
    obs = jax.random.normal(k_obs, (B, obs_dim), jnp.float32)
    params = init_params(k_par, obs_dim, hidden_dim, n_ensembles)

    # One-time weight padding / packing (hoisted out of the hot path).
    prep = prepare_params(params)

    ref_f32 = vfuncs_reference(obs, params)
    ref_bf16 = vfuncs_reference_bf16(obs, params)

    # Default path (folded ensembles: grid over batch tiles only).
    out = jax.block_until_ready(vfuncs_forward(obs, prep))
    assert out.shape == (B, n_ensembles, 1), out.shape
    err_tight = float(jnp.max(jnp.abs(out - ref_bf16)))
    err_loose = float(jnp.max(jnp.abs(out - ref_f32)))
    assert err_tight < 1e-2, f"mismatch vs bf16-matched reference: {err_tight}"
    assert err_loose < 1e-1, f"mismatch vs f32 reference: {err_loose}"

    # Ensemble-outer grid path (fallback used when folded weights exceed VMEM).
    out2 = jax.block_until_ready(vfuncs_forward(obs, prep, force_fold=False))
    assert out2.shape == (B, n_ensembles, 1), out2.shape
    err2 = float(jnp.max(jnp.abs(out2 - ref_bf16)))
    assert err2 < 1e-2, f"ensemble-outer path mismatch: {err2}"

    print("KERNEL_OK")
</pallas_src>

<mosaic_0001>
module attributes {stable_mosaic.version = 11 : i64} {
  func.func @vfuncs_kernel(%arg0: i32, %arg1: memref<16x128xbf16, #tpu.memory_space<vmem>>, %arg2: memref<2x128x128xbf16, #tpu.memory_space<vmem>>, %arg3: memref<2x128x128xbf16, #tpu.memory_space<vmem>>, %arg4: memref<2x8x128xf32, #tpu.memory_space<vmem>>, %arg5: memref<2x16xf32, #tpu.memory_space<vmem>>) attributes {dimension_semantics = [#tpu.dimension_semantics<parallel>], iteration_bounds = array<i64: 1>, scalar_prefetch = 0 : i64, scratch_operands = 0 : i64, tpu.core_type = #tpu.core_type<tc>, window_params = [{transform_indices = @transform_0, window_bounds = array<i64: 16, 128>}, {pipeline_mode = #tpu.pipeline_mode<synchronous>, transform_indices = @transform_1, window_bounds = array<i64: 2, 128, 128>}, {pipeline_mode = #tpu.pipeline_mode<synchronous>, transform_indices = @transform_2, window_bounds = array<i64: 2, 128, 128>}, {pipeline_mode = #tpu.pipeline_mode<synchronous>, transform_indices = @transform_3, window_bounds = array<i64: 2, 8, 128>}, {transform_indices = @transform_4, window_bounds = array<i64: 2, 16>}]} {
    %c0 = arith.constant 0 : index
    %c0_0 = arith.constant 0 : index
    %0 = vector.load %arg1[%c0, %c0_0] : memref<16x128xbf16, #tpu.memory_space<vmem>>, vector<16x128xbf16>
    %1 = tpu.iota {dimensions = array<i32: 1>} : vector<1x128xi32>
    %c32_i32 = arith.constant 32 : i32
    %2 = vector.broadcast %c32_i32 : i32 to vector<1x128xi32>
    %3 = arith.cmpi slt, %1, %2 : vector<1x128xi32>
    %4 = arith.extui %3 : vector<1x128xi1> to vector<1x128xi32>
    %5 = arith.sitofp %4 : vector<1x128xi32> to vector<1x128xf32>
    %c0_1 = arith.constant 0 : index
    %c0_2 = arith.constant 0 : index
    %c0_3 = arith.constant 0 : index
    %6 = vector.load %arg4[%c0_1, %c0_2, %c0_3] : memref<2x8x128xf32, #tpu.memory_space<vmem>>, vector<1x8x128xf32>
    %7 = vector.shape_cast %6 : vector<1x8x128xf32> to vector<8x128xf32>
    %c0_4 = arith.constant 0 : index
    %c0_5 = arith.constant 0 : index
    %c0_6 = arith.constant 0 : index
    %8 = vector.load %arg2[%c0_4, %c0_5, %c0_6] : memref<2x128x128xbf16, #tpu.memory_space<vmem>>, vector<1x128x128xbf16>
    %9 = vector.shape_cast %8 : vector<1x128x128xbf16> to vector<128x128xbf16>
    %cst = arith.constant dense<0.000000e+00> : vector<16x128xf32>
    %10 = tpu.matmul %0, %9, %cst {dimension_numbers = #tpu.dot_dimension_numbers<[1], [0], [0], [1], [0, 0, 1, 1], [], []>} : vector<16x128xbf16>, vector<128x128xbf16>, vector<16x128xf32> -> vector<16x128xf32>
    %11 = vector.extract_strided_slice %7 {offsets = [0, 0], sizes = [1, 128], strides = [1, 1]} : vector<8x128xf32> to vector<1x128xf32>
    %12 = vector.shape_cast %11 : vector<1x128xf32> to vector<128xf32>
    %13 = vector.shape_cast %12 : vector<128xf32> to vector<1x128xf32>
    %14 = vector.broadcast %13 : vector<1x128xf32> to vector<16x128xf32>
    %15 = arith.addf %10, %14 : vector<16x128xf32>
    %16 = vector.extract_strided_slice %7 {offsets = [1, 0], sizes = [1, 128], strides = [1, 1]} : vector<8x128xf32> to vector<1x128xf32>
    %17 = vector.shape_cast %16 : vector<1x128xf32> to vector<128xf32>
    %18 = vector.extract_strided_slice %7 {offsets = [2, 0], sizes = [1, 128], strides = [1, 1]} : vector<8x128xf32> to vector<1x128xf32>
    %19 = vector.shape_cast %18 : vector<1x128xf32> to vector<128xf32>
    %cst_7 = arith.constant dense<0.000000e+00> : vector<16xf32>
    %20 = vector.multi_reduction <add>, %15, %cst_7 [1] : vector<16x128xf32> to vector<16xf32>
    %21 = vector.shape_cast %20 : vector<16xf32> to vector<16x1xf32>
    %cst_8 = arith.constant 3.125000e-02 : f32
    %22 = vector.broadcast %cst_8 : f32 to vector<16x1xf32>
    %23 = arith.mulf %21, %22 : vector<16x1xf32>
    %24 = vector.broadcast %23 : vector<16x1xf32> to vector<16x128xf32>
    %25 = arith.subf %15, %24 : vector<16x128xf32>
    %26 = vector.broadcast %5 : vector<1x128xf32> to vector<16x128xf32>
    %27 = arith.mulf %25, %26 : vector<16x128xf32>
    %28 = arith.mulf %27, %27 : vector<16x128xf32>
    %cst_9 = arith.constant dense<0.000000e+00> : vector<16xf32>
    %29 = vector.multi_reduction <add>, %28, %cst_9 [1] : vector<16x128xf32> to vector<16xf32>
    %30 = vector.shape_cast %29 : vector<16xf32> to vector<16x1xf32>
    %cst_10 = arith.constant 3.125000e-02 : f32
    %31 = vector.broadcast %cst_10 : f32 to vector<16x1xf32>
    %32 = arith.mulf %30, %31 : vector<16x1xf32>
    %cst_11 = arith.constant 9.99999974E-6 : f32
    %33 = vector.broadcast %cst_11 : f32 to vector<16x1xf32>
    %34 = arith.addf %32, %33 : vector<16x1xf32>
    %35 = math.rsqrt %34 : vector<16x1xf32>
    %36 = vector.broadcast %35 : vector<16x1xf32> to vector<16x128xf32>
    %37 = arith.mulf %27, %36 : vector<16x128xf32>
    %38 = vector.shape_cast %17 : vector<128xf32> to vector<1x128xf32>
    %39 = vector.broadcast %38 : vector<1x128xf32> to vector<16x128xf32>
    %40 = arith.mulf %37, %39 : vector<16x128xf32>
    %41 = vector.shape_cast %19 : vector<128xf32> to vector<1x128xf32>
    %42 = vector.broadcast %41 : vector<1x128xf32> to vector<16x128xf32>
    %43 = arith.addf %40, %42 : vector<16x128xf32>
    %cst_12 = arith.constant 5.000000e-01 : f32
    %44 = vector.broadcast %cst_12 : f32 to vector<16x128xf32>
    %45 = arith.mulf %44, %43 : vector<16x128xf32>
    %cst_13 = arith.constant 4.471500e-02 : f32
    %46 = vector.broadcast %cst_13 : f32 to vector<16x128xf32>
    %47 = arith.mulf %46, %43 : vector<16x128xf32>
    %48 = arith.mulf %47, %43 : vector<16x128xf32>
    %49 = arith.mulf %48, %43 : vector<16x128xf32>
    %50 = arith.addf %43, %49 : vector<16x128xf32>
    %cst_14 = arith.constant 0.797884583 : f32
    %51 = vector.broadcast %cst_14 : f32 to vector<16x128xf32>
    %52 = arith.mulf %51, %50 : vector<16x128xf32>
    %53 = math.tanh %52 : vector<16x128xf32>
    %cst_15 = arith.constant 1.000000e+00 : f32
    %54 = vector.broadcast %cst_15 : f32 to vector<16x128xf32>
    %55 = arith.addf %54, %53 : vector<16x128xf32>
    %56 = arith.mulf %45, %55 : vector<16x128xf32>
    %57 = arith.truncf %56 : vector<16x128xf32> to vector<16x128xbf16>
    %c0_16 = arith.constant 0 : index
    %c0_17 = arith.constant 0 : index
    %c0_18 = arith.constant 0 : index
    %58 = vector.load %arg3[%c0_16, %c0_17, %c0_18] : memref<2x128x128xbf16, #tpu.memory_space<vmem>>, vector<1x128x128xbf16>
    %59 = vector.shape_cast %58 : vector<1x128x128xbf16> to vector<128x128xbf16>
    %cst_19 = arith.constant dense<0.000000e+00> : vector<16x128xf32>
    %60 = tpu.matmul %57, %59, %cst_19 {dimension_numbers = #tpu.dot_dimension_numbers<[1], [0], [0], [1], [0, 0, 1, 1], [], []>} : vector<16x128xbf16>, vector<128x128xbf16>, vector<16x128xf32> -> vector<16x128xf32>
    %61 = vector.extract_strided_slice %7 {offsets = [3, 0], sizes = [1, 128], strides = [1, 1]} : vector<8x128xf32> to vector<1x128xf32>
    %62 = vector.shape_cast %61 : vector<1x128xf32> to vector<128xf32>
    %63 = vector.shape_cast %62 : vector<128xf32> to vector<1x128xf32>
    %64 = vector.broadcast %63 : vector<1x128xf32> to vector<16x128xf32>
    %65 = arith.addf %60, %64 : vector<16x128xf32>
    %66 = vector.extract_strided_slice %7 {offsets = [4, 0], sizes = [1, 128], strides = [1, 1]} : vector<8x128xf32> to vector<1x128xf32>
    %67 = vector.shape_cast %66 : vector<1x128xf32> to vector<128xf32>
    %68 = vector.extract_strided_slice %7 {offsets = [5, 0], sizes = [1, 128], strides = [1, 1]} : vector<8x128xf32> to vector<1x128xf32>
    %69 = vector.shape_cast %68 : vector<1x128xf32> to vector<128xf32>
    %cst_20 = arith.constant dense<0.000000e+00> : vector<16xf32>
    %70 = vector.multi_reduction <add>, %65, %cst_20 [1] : vector<16x128xf32> to vector<16xf32>
    %71 = vector.shape_cast %70 : vector<16xf32> to vector<16x1xf32>
    %cst_21 = arith.constant 3.125000e-02 : f32
    %72 = vector.broadcast %cst_21 : f32 to vector<16x1xf32>
    %73 = arith.mulf %71, %72 : vector<16x1xf32>
    %74 = vector.broadcast %73 : vector<16x1xf32> to vector<16x128xf32>
    %75 = arith.subf %65, %74 : vector<16x128xf32>
    %76 = vector.broadcast %5 : vector<1x128xf32> to vector<16x128xf32>
    %77 = arith.mulf %75, %76 : vector<16x128xf32>
    %78 = arith.mulf %77, %77 : vector<16x128xf32>
    %cst_22 = arith.constant dense<0.000000e+00> : vector<16xf32>
    %79 = vector.multi_reduction <add>, %78, %cst_22 [1] : vector<16x128xf32> to vector<16xf32>
    %80 = vector.shape_cast %79 : vector<16xf32> to vector<16x1xf32>
    %cst_23 = arith.constant 3.125000e-02 : f32
    %81 = vector.broadcast %cst_23 : f32 to vector<16x1xf32>
    %82 = arith.mulf %80, %81 : vector<16x1xf32>
    %cst_24 = arith.constant 9.99999974E-6 : f32
    %83 = vector.broadcast %cst_24 : f32 to vector<16x1xf32>
    %84 = arith.addf %82, %83 : vector<16x1xf32>
    %85 = math.rsqrt %84 : vector<16x1xf32>
    %86 = vector.broadcast %85 : vector<16x1xf32> to vector<16x128xf32>
    %87 = arith.mulf %77, %86 : vector<16x128xf32>
    %88 = vector.shape_cast %67 : vector<128xf32> to vector<1x128xf32>
    %89 = vector.broadcast %88 : vector<1x128xf32> to vector<16x128xf32>
    %90 = arith.mulf %87, %89 : vector<16x128xf32>
    %91 = vector.shape_cast %69 : vector<128xf32> to vector<1x128xf32>
    %92 = vector.broadcast %91 : vector<1x128xf32> to vector<16x128xf32>
    %93 = arith.addf %90, %92 : vector<16x128xf32>
    %cst_25 = arith.constant 5.000000e-01 : f32
    %94 = vector.broadcast %cst_25 : f32 to vector<16x128xf32>
    %95 = arith.mulf %94, %93 : vector<16x128xf32>
    %cst_26 = arith.constant 4.471500e-02 : f32
    %96 = vector.broadcast %cst_26 : f32 to vector<16x128xf32>
    %97 = arith.mulf %96, %93 : vector<16x128xf32>
    %98 = arith.mulf %97, %93 : vector<16x128xf32>
    %99 = arith.mulf %98, %93 : vector<16x128xf32>
    %100 = arith.addf %93, %99 : vector<16x128xf32>
    %cst_27 = arith.constant 0.797884583 : f32
    %101 = vector.broadcast %cst_27 : f32 to vector<16x128xf32>
    %102 = arith.mulf %101, %100 : vector<16x128xf32>
    %103 = math.tanh %102 : vector<16x128xf32>
    %cst_28 = arith.constant 1.000000e+00 : f32
    %104 = vector.broadcast %cst_28 : f32 to vector<16x128xf32>
    %105 = arith.addf %104, %103 : vector<16x128xf32>
    %106 = arith.mulf %95, %105 : vector<16x128xf32>
    %107 = vector.extract_strided_slice %7 {offsets = [6, 0], sizes = [1, 128], strides = [1, 1]} : vector<8x128xf32> to vector<1x128xf32>
    %cst_29 = arith.constant dense<0.000000e+00> : vector<1x16xf32>
    %108 = tpu.matmul %107, %106, %cst_29 {dimension_numbers = #tpu.dot_dimension_numbers<[1], [1], [0], [0], [0, 0, 1, 0], [], []>} : vector<1x128xf32>, vector<16x128xf32>, vector<1x16xf32> -> vector<1x16xf32>
    %109 = vector.extract_strided_slice %7 {offsets = [7, 0], sizes = [1, 1], strides = [1, 1]} : vector<8x128xf32> to vector<1x1xf32>
    %110 = vector.broadcast %109 : vector<1x1xf32> to vector<1x16xf32>
    %111 = arith.addf %108, %110 : vector<1x16xf32>
    %c0_30 = arith.constant 0 : index
    %c0_31 = arith.constant 0 : index
    %112 = vector.load %arg5[%c0_30, %c0_31] : memref<2x16xf32, #tpu.memory_space<vmem>>, vector<1x16xf32>
    tpu.vector_store %arg5[%c0_30, %c0_31], %111 {strides = array<i32>} : memref<2x16xf32, #tpu.memory_space<vmem>>, vector<1x16xf32>,
    %c1 = arith.constant 1 : index
    %c0_32 = arith.constant 0 : index
    %c0_33 = arith.constant 0 : index
    %113 = vector.load %arg4[%c1, %c0_32, %c0_33] : memref<2x8x128xf32, #tpu.memory_space<vmem>>, vector<1x8x128xf32>
    %114 = vector.shape_cast %113 : vector<1x8x128xf32> to vector<8x128xf32>
    %c1_34 = arith.constant 1 : index
    %c0_35 = arith.constant 0 : index
    %c0_36 = arith.constant 0 : index
    %115 = vector.load %arg2[%c1_34, %c0_35, %c0_36] : memref<2x128x128xbf16, #tpu.memory_space<vmem>>, vector<1x128x128xbf16>
    %116 = vector.shape_cast %115 : vector<1x128x128xbf16> to vector<128x128xbf16>
    %cst_37 = arith.constant dense<0.000000e+00> : vector<16x128xf32>
    %117 = tpu.matmul %0, %116, %cst_37 {dimension_numbers = #tpu.dot_dimension_numbers<[1], [0], [0], [1], [0, 0, 1, 1], [], []>} : vector<16x128xbf16>, vector<128x128xbf16>, vector<16x128xf32> -> vector<16x128xf32>
    %118 = vector.extract_strided_slice %114 {offsets = [0, 0], sizes = [1, 128], strides = [1, 1]} : vector<8x128xf32> to vector<1x128xf32>
    %119 = vector.shape_cast %118 : vector<1x128xf32> to vector<128xf32>
    %120 = vector.shape_cast %119 : vector<128xf32> to vector<1x128xf32>
    %121 = vector.broadcast %120 : vector<1x128xf32> to vector<16x128xf32>
    %122 = arith.addf %117, %121 : vector<16x128xf32>
    %123 = vector.extract_strided_slice %114 {offsets = [1, 0], sizes = [1, 128], strides = [1, 1]} : vector<8x128xf32> to vector<1x128xf32>
    %124 = vector.shape_cast %123 : vector<1x128xf32> to vector<128xf32>
    %125 = vector.extract_strided_slice %114 {offsets = [2, 0], sizes = [1, 128], strides = [1, 1]} : vector<8x128xf32> to vector<1x128xf32>
    %126 = vector.shape_cast %125 : vector<1x128xf32> to vector<128xf32>
    %cst_38 = arith.constant dense<0.000000e+00> : vector<16xf32>
    %127 = vector.multi_reduction <add>, %122, %cst_38 [1] : vector<16x128xf32> to vector<16xf32>
    %128 = vector.shape_cast %127 : vector<16xf32> to vector<16x1xf32>
    %cst_39 = arith.constant 3.125000e-02 : f32
    %129 = vector.broadcast %cst_39 : f32 to vector<16x1xf32>
    %130 = arith.mulf %128, %129 : vector<16x1xf32>
    %131 = vector.broadcast %130 : vector<16x1xf32> to vector<16x128xf32>
    %132 = arith.subf %122, %131 : vector<16x128xf32>
    %133 = vector.broadcast %5 : vector<1x128xf32> to vector<16x128xf32>
    %134 = arith.mulf %132, %133 : vector<16x128xf32>
    %135 = arith.mulf %134, %134 : vector<16x128xf32>
    %cst_40 = arith.constant dense<0.000000e+00> : vector<16xf32>
    %136 = vector.multi_reduction <add>, %135, %cst_40 [1] : vector<16x128xf32> to vector<16xf32>
    %137 = vector.shape_cast %136 : vector<16xf32> to vector<16x1xf32>
    %cst_41 = arith.constant 3.125000e-02 : f32
    %138 = vector.broadcast %cst_41 : f32 to vector<16x1xf32>
    %139 = arith.mulf %137, %138 : vector<16x1xf32>
    %cst_42 = arith.constant 9.99999974E-6 : f32
    %140 = vector.broadcast %cst_42 : f32 to vector<16x1xf32>
    %141 = arith.addf %139, %140 : vector<16x1xf32>
    %142 = math.rsqrt %141 : vector<16x1xf32>
    %143 = vector.broadcast %142 : vector<16x1xf32> to vector<16x128xf32>
    %144 = arith.mulf %134, %143 : vector<16x128xf32>
    %145 = vector.shape_cast %124 : vector<128xf32> to vector<1x128xf32>
    %146 = vector.broadcast %145 : vector<1x128xf32> to vector<16x128xf32>
    %147 = arith.mulf %144, %146 : vector<16x128xf32>
    %148 = vector.shape_cast %126 : vector<128xf32> to vector<1x128xf32>
    %149 = vector.broadcast %148 : vector<1x128xf32> to vector<16x128xf32>
    %150 = arith.addf %147, %149 : vector<16x128xf32>
    %cst_43 = arith.constant 5.000000e-01 : f32
    %151 = vector.broadcast %cst_43 : f32 to vector<16x128xf32>
    %152 = arith.mulf %151, %150 : vector<16x128xf32>
    %cst_44 = arith.constant 4.471500e-02 : f32
    %153 = vector.broadcast %cst_44 : f32 to vector<16x128xf32>
    %154 = arith.mulf %153, %150 : vector<16x128xf32>
    %155 = arith.mulf %154, %150 : vector<16x128xf32>
    %156 = arith.mulf %155, %150 : vector<16x128xf32>
    %157 = arith.addf %150, %156 : vector<16x128xf32>
    %cst_45 = arith.constant 0.797884583 : f32
    %158 = vector.broadcast %cst_45 : f32 to vector<16x128xf32>
    %159 = arith.mulf %158, %157 : vector<16x128xf32>
    %160 = math.tanh %159 : vector<16x128xf32>
    %cst_46 = arith.constant 1.000000e+00 : f32
    %161 = vector.broadcast %cst_46 : f32 to vector<16x128xf32>
    %162 = arith.addf %161, %160 : vector<16x128xf32>
    %163 = arith.mulf %152, %162 : vector<16x128xf32>
    %164 = arith.truncf %163 : vector<16x128xf32> to vector<16x128xbf16>
    %c1_47 = arith.constant 1 : index
    %c0_48 = arith.constant 0 : index
    %c0_49 = arith.constant 0 : index
    %165 = vector.load %arg3[%c1_47, %c0_48, %c0_49] : memref<2x128x128xbf16, #tpu.memory_space<vmem>>, vector<1x128x128xbf16>
    %166 = vector.shape_cast %165 : vector<1x128x128xbf16> to vector<128x128xbf16>
    %cst_50 = arith.constant dense<0.000000e+00> : vector<16x128xf32>
    %167 = tpu.matmul %164, %166, %cst_50 {dimension_numbers = #tpu.dot_dimension_numbers<[1], [0], [0], [1], [0, 0, 1, 1], [], []>} : vector<16x128xbf16>, vector<128x128xbf16>, vector<16x128xf32> -> vector<16x128xf32>
    %168 = vector.extract_strided_slice %114 {offsets = [3, 0], sizes = [1, 128], strides = [1, 1]} : vector<8x128xf32> to vector<1x128xf32>
    %169 = vector.shape_cast %168 : vector<1x128xf32> to vector<128xf32>
    %170 = vector.shape_cast %169 : vector<128xf32> to vector<1x128xf32>
    %171 = vector.broadcast %170 : vector<1x128xf32> to vector<16x128xf32>
    %172 = arith.addf %167, %171 : vector<16x128xf32>
    %173 = vector.extract_strided_slice %114 {offsets = [4, 0], sizes = [1, 128], strides = [1, 1]} : vector<8x128xf32> to vector<1x128xf32>
    %174 = vector.shape_cast %173 : vector<1x128xf32> to vector<128xf32>
    %175 = vector.extract_strided_slice %114 {offsets = [5, 0], sizes = [1, 128], strides = [1, 1]} : vector<8x128xf32> to vector<1x128xf32>
    %176 = vector.shape_cast %175 : vector<1x128xf32> to vector<128xf32>
    %cst_51 = arith.constant dense<0.000000e+00> : vector<16xf32>
    %177 = vector.multi_reduction <add>, %172, %cst_51 [1] : vector<16x128xf32> to vector<16xf32>
    %178 = vector.shape_cast %177 : vector<16xf32> to vector<16x1xf32>
    %cst_52 = arith.constant 3.125000e-02 : f32
    %179 = vector.broadcast %cst_52 : f32 to vector<16x1xf32>
    %180 = arith.mulf %178, %179 : vector<16x1xf32>
    %181 = vector.broadcast %180 : vector<16x1xf32> to vector<16x128xf32>
    %182 = arith.subf %172, %181 : vector<16x128xf32>
    %183 = vector.broadcast %5 : vector<1x128xf32> to vector<16x128xf32>
    %184 = arith.mulf %182, %183 : vector<16x128xf32>
    %185 = arith.mulf %184, %184 : vector<16x128xf32>
    %cst_53 = arith.constant dense<0.000000e+00> : vector<16xf32>
    %186 = vector.multi_reduction <add>, %185, %cst_53 [1] : vector<16x128xf32> to vector<16xf32>
    %187 = vector.shape_cast %186 : vector<16xf32> to vector<16x1xf32>
    %cst_54 = arith.constant 3.125000e-02 : f32
    %188 = vector.broadcast %cst_54 : f32 to vector<16x1xf32>
    %189 = arith.mulf %187, %188 : vector<16x1xf32>
    %cst_55 = arith.constant 9.99999974E-6 : f32
    %190 = vector.broadcast %cst_55 : f32 to vector<16x1xf32>
    %191 = arith.addf %189, %190 : vector<16x1xf32>
    %192 = math.rsqrt %191 : vector<16x1xf32>
    %193 = vector.broadcast %192 : vector<16x1xf32> to vector<16x128xf32>
    %194 = arith.mulf %184, %193 : vector<16x128xf32>
    %195 = vector.shape_cast %174 : vector<128xf32> to vector<1x128xf32>
    %196 = vector.broadcast %195 : vector<1x128xf32> to vector<16x128xf32>
    %197 = arith.mulf %194, %196 : vector<16x128xf32>
    %198 = vector.shape_cast %176 : vector<128xf32> to vector<1x128xf32>
    %199 = vector.broadcast %198 : vector<1x128xf32> to vector<16x128xf32>
    %200 = arith.addf %197, %199 : vector<16x128xf32>
    %cst_56 = arith.constant 5.000000e-01 : f32
    %201 = vector.broadcast %cst_56 : f32 to vector<16x128xf32>
    %202 = arith.mulf %201, %200 : vector<16x128xf32>
    %cst_57 = arith.constant 4.471500e-02 : f32
    %203 = vector.broadcast %cst_57 : f32 to vector<16x128xf32>
    %204 = arith.mulf %203, %200 : vector<16x128xf32>
    %205 = arith.mulf %204, %200 : vector<16x128xf32>
    %206 = arith.mulf %205, %200 : vector<16x128xf32>
    %207 = arith.addf %200, %206 : vector<16x128xf32>
    %cst_58 = arith.constant 0.797884583 : f32
    %208 = vector.broadcast %cst_58 : f32 to vector<16x128xf32>
    %209 = arith.mulf %208, %207 : vector<16x128xf32>
    %210 = math.tanh %209 : vector<16x128xf32>
    %cst_59 = arith.constant 1.000000e+00 : f32
    %211 = vector.broadcast %cst_59 : f32 to vector<16x128xf32>
    %212 = arith.addf %211, %210 : vector<16x128xf32>
    %213 = arith.mulf %202, %212 : vector<16x128xf32>
    %214 = vector.extract_strided_slice %114 {offsets = [6, 0], sizes = [1, 128], strides = [1, 1]} : vector<8x128xf32> to vector<1x128xf32>
    %cst_60 = arith.constant dense<0.000000e+00> : vector<1x16xf32>
    %215 = tpu.matmul %214, %213, %cst_60 {dimension_numbers = #tpu.dot_dimension_numbers<[1], [1], [0], [0], [0, 0, 1, 0], [], []>} : vector<1x128xf32>, vector<16x128xf32>, vector<1x16xf32> -> vector<1x16xf32>
    %216 = vector.extract_strided_slice %114 {offsets = [7, 0], sizes = [1, 1], strides = [1, 1]} : vector<8x128xf32> to vector<1x1xf32>
    %217 = vector.broadcast %216 : vector<1x1xf32> to vector<1x16xf32>
    %218 = arith.addf %215, %217 : vector<1x16xf32>
    %c1_61 = arith.constant 1 : index
    %c0_62 = arith.constant 0 : index
    %219 = vector.load %arg5[%c1_61, %c0_62] : memref<2x16xf32, #tpu.memory_space<vmem>>, vector<1x16xf32>
    tpu.vector_store %arg5[%c1_61, %c0_62], %218 {strides = array<i32>} : memref<2x16xf32, #tpu.memory_space<vmem>>, vector<1x16xf32>,
    return
  }
  func.func @transform_0(%arg0: i32) -> (i32, i32) {
    %c0_i32 = arith.constant 0 : i32
    %c0_i32_0 = arith.constant 0 : i32
    return %arg0, %c0_i32 : i32, i32
  }
  func.func @transform_1(%arg0: i32) -> (i32, i32, i32) {
    %c0_i32 = arith.constant 0 : i32
    %c0_i32_0 = arith.constant 0 : i32
    %c0_i32_1 = arith.constant 0 : i32
    %c0_i32_2 = arith.constant 0 : i32
    return %c0_i32, %c0_i32_0, %c0_i32_1 : i32, i32, i32
  }
  func.func @transform_2(%arg0: i32) -> (i32, i32, i32) {
    %c0_i32 = arith.constant 0 : i32
    %c0_i32_0 = arith.constant 0 : i32
    %c0_i32_1 = arith.constant 0 : i32
    %c0_i32_2 = arith.constant 0 : i32
    return %c0_i32, %c0_i32_0, %c0_i32_1 : i32, i32, i32
  }
  func.func @transform_3(%arg0: i32) -> (i32, i32, i32) {
    %c0_i32 = arith.constant 0 : i32
    %c0_i32_0 = arith.constant 0 : i32
    %c0_i32_1 = arith.constant 0 : i32
    %c0_i32_2 = arith.constant 0 : i32
    return %c0_i32, %c0_i32_0, %c0_i32_1 : i32, i32, i32
  }
  func.func @transform_4(%arg0: i32) -> (i32, i32) {
    %c0_i32 = arith.constant 0 : i32
    %c0_i32_0 = arith.constant 0 : i32
    return %c0_i32, %arg0 : i32, i32
  }
}

</mosaic_0001>

<llo_original>
// kernel: tpu_custom_call.1
$region0: #{tpu_custom_call.1}
  #allocation0 [shape = 'u32[]', space=smem, size = 0x4, offset = 0x4, fixed_abs, tag = 'smem constant byte address 0x4 - core index']
  #allocation1 [shape = 'u32[144,128]{1,0:T(1,128)}', space=vmem, size = 0x12000, scoped, tag = 'internal scratch']
  %s0 = inlined_call_operand.hbm [shape: bf16[16,128], index: 0, kind: input, shape index: {}]
  %s1 = inlined_call_operand.hbm [shape: bf16[2,128,128], index: 1, kind: input, shape index: {}]
  %s2 = inlined_call_operand.hbm [shape: bf16[2,128,128], index: 2, kind: input, shape index: {}]
  %s3 = inlined_call_operand.hbm [shape: f32[2,8,128], index: 3, kind: input, shape index: {}]
  %s4 = inlined_call_operand.hbm [shape: f32[2,16], index: 4, kind: output, shape index: {}]
  %s5 = sld [smem:[#allocation0]]
  $region42: #{tpu_custom_call.1} parent=0
    _
  %s7 = ssub.s32 1, %s5
  %s8 = scalar_select 0, %s7, %s5
  $region1: #{tpu_custom_call.1} parent=0
    #allocation2 [shape = 'u8[4096]{0}', space=vmem, size = 0x1000, scoped, tag = 'input window, operand 0, single buffered']
    #allocation3 [shape = 's32[1]{0}', space=sflag, size = 0x4, scoped, tag = 'scoped memory for tpu_custom_call.1']
    #allocation4 [shape = 's32[1]{0}', space=sflag, size = 0x4, scoped, tag = 'scoped memory for tpu_custom_call.1']
    #allocation5 [shape = 'u8[65536]{0}', space=vmem, size = 0x10000, scoped, tag = 'input window, operand 1, single buffered']
    #allocation6 [shape = 's32[1]{0}', space=sflag, size = 0x4, scoped, tag = 'scoped memory for tpu_custom_call.1']
    #allocation7 [shape = 'u8[65536]{0}', space=vmem, size = 0x10000, scoped, tag = 'input window, operand 2, single buffered']
    #allocation8 [shape = 'u8[8192]{0}', space=vmem, size = 0x2000, scoped, tag = 'input window, operand 3, single buffered']
    #allocation9 [shape = 's32[1]{0}', space=sflag, size = 0x4, scoped, tag = 'scoped memory for tpu_custom_call.1']
    #allocation10 [shape = 'u8[1024]{0}', space=vmem, size = 0x400, scoped, tag = 'output window, operand 0, single buffered']
    %9 = vsyncpa [#allocation3], 0
    %10 = vsyncpa [#allocation6], 0
    %11 = vsyncpa [#allocation9], 0
    %12 = vsyncpa [#allocation4], 0
    // Predicated region
    $region2: #{tpu_custom_call.1} parent=1 // pred_check
      _
    $region3: #{tpu_custom_call.1} parent=1 // pred_check_branch
      %14 = sbr.rel (0) target = $region5
    $region4: #{tpu_custom_call.1} parent=1 // pred_region
      %s16 = ssub.s32 128, 128
      %17 = vsyncadd [#allocation3], %s16
      %s18 = sshll.u32 [#allocation2], 4
      %s19 = int_to_ptr.vmem [resolvable:$true] %s18
      %24 = dma.hbm_to_vmem [thread:$0]  %s0, 128, %s19, [#allocation3], 64, 64, 4
    $region5: #{tpu_custom_call.1} parent=1 // pred_fallthru
      _
    // Predicated region
    $region6: #{tpu_custom_call.1} parent=1 // pred_check
      _
    $region7: #{tpu_custom_call.1} parent=1 // pred_check_branch
      %26 = sbr.rel (0) target = $region9
    $region8: #{tpu_custom_call.1} parent=1 // pred_region
      %s28 = ssub.s32 2048, 2048
      %29 = vsyncadd [#allocation6], %s28
      %s30 = sshll.u32 [#allocation5], 4
      %s31 = int_to_ptr.vmem [resolvable:$true] %s30
      %36 = dma.hbm_to_vmem [thread:$0]  %s1, 2048, %s31, [#allocation6], 64, 64, 4
    $region9: #{tpu_custom_call.1} parent=1 // pred_fallthru
      _
    // Predicated region
    $region10: #{tpu_custom_call.1} parent=1 // pred_check
      _
    $region11: #{tpu_custom_call.1} parent=1 // pred_check_branch
      %38 = sbr.rel (0) target = $region13
    $region12: #{tpu_custom_call.1} parent=1 // pred_region
      %s40 = ssub.s32 2048, 2048
      %41 = vsyncadd [#allocation6], %s40
      %s42 = sshll.u32 [#allocation7], 4
      %s43 = int_to_ptr.vmem [resolvable:$true] %s42
      %48 = dma.hbm_to_vmem [thread:$0]  %s2, 2048, %s43, [#allocation6], 64, 64, 4
    $region13: #{tpu_custom_call.1} parent=1 // pred_fallthru
      _
    // Predicated region
    $region14: #{tpu_custom_call.1} parent=1 // pred_check
      _
    $region15: #{tpu_custom_call.1} parent=1 // pred_check_branch
      %50 = sbr.rel (0) target = $region17
    $region16: #{tpu_custom_call.1} parent=1 // pred_region
      %s52 = ssub.s32 256, 256
      %53 = vsyncadd [#allocation9], %s52
      %s54 = sshll.u32 [#allocation8], 4
      %s55 = int_to_ptr.vmem [resolvable:$true] %s54
      %60 = dma.hbm_to_vmem [thread:$0]  %s3, 256, %s55, [#allocation9], 128, 128, 8
    $region17: #{tpu_custom_call.1} parent=1 // pred_fallthru
      _
    // Predicated region
    $region18: #{tpu_custom_call.1} parent=1 // pred_check
      _
    $region19: #{tpu_custom_call.1} parent=1 // pred_check_branch
      %62 = sbr.rel (0) target = $region21
    $region20: #{tpu_custom_call.1} parent=1 // pred_region
      %63 = dma.done [#allocation3], 128
    $region21: #{tpu_custom_call.1} parent=1 // pred_fallthru
      _
    // Predicated region
    $region22: #{tpu_custom_call.1} parent=1 // pred_check
      _
    $region23: #{tpu_custom_call.1} parent=1 // pred_check_branch
      %65 = sbr.rel (0) target = $region25
    $region24: #{tpu_custom_call.1} parent=1 // pred_region
      %66 = dma.done [#allocation6], 2048
    $region25: #{tpu_custom_call.1} parent=1 // pred_fallthru
      _
    // Predicated region
    $region26: #{tpu_custom_call.1} parent=1 // pred_check
      _
    $region27: #{tpu_custom_call.1} parent=1 // pred_check_branch
      %68 = sbr.rel (0) target = $region29
    $region28: #{tpu_custom_call.1} parent=1 // pred_region
      %69 = dma.done [#allocation6], 2048
    $region29: #{tpu_custom_call.1} parent=1 // pred_fallthru
      _
    // Predicated region
    $region30: #{tpu_custom_call.1} parent=1 // pred_check
      _
    $region31: #{tpu_custom_call.1} parent=1 // pred_check_branch
      %71 = sbr.rel (0) target = $region33
    $region32: #{tpu_custom_call.1} parent=1 // pred_region
      %72 = dma.done [#allocation9], 256
    $region33: #{tpu_custom_call.1} parent=1 // pred_fallthru
      _
    %v74 = vld [vmem:[#allocation2] sm:$0xf]
    %v75 = vld [vmem:[#allocation2 + $0x4] sm:$0xf]
    %v76 = vlaneseq
    %v77 = vand.u32 %v76, 127
    %vm78 = vcmp.lt.s32.totalorder %v77, 32
    %v79 = vsel %vm78, 1, 0
    %v80 = vcvt.s32.f32 %v79
    %v81 = vld [vmem:[#allocation8] sm:$0xff]
    %v82 = vld [vmem:[#allocation5] sm:$0xf]
    %v83 = vld [vmem:[#allocation5 + $0x4] sm:$0xf]
    %v84 = vld [vmem:[#allocation5 + $0x8] sm:$0xf]
    %v85 = vld [vmem:[#allocation5 + $0xc] sm:$0xf]
    %v86 = vld [vmem:[#allocation5 + $0x10] sm:$0xf]
    %v87 = vld [vmem:[#allocation5 + $0x14] sm:$0xf]
    %v88 = vld [vmem:[#allocation5 + $0x18] sm:$0xf]
    %v89 = vld [vmem:[#allocation5 + $0x1c] sm:$0xf]
    %v90 = vld [vmem:[#allocation5 + $0x20] sm:$0xf]
    %v91 = vld [vmem:[#allocation5 + $0x24] sm:$0xf]
    %v92 = vld [vmem:[#allocation5 + $0x28] sm:$0xf]
    %v93 = vld [vmem:[#allocation5 + $0x2c] sm:$0xf]
    %v94 = vld [vmem:[#allocation5 + $0x30] sm:$0xf]
    %v95 = vld [vmem:[#allocation5 + $0x34] sm:$0xf]
    %v96 = vld [vmem:[#allocation5 + $0x38] sm:$0xf]
    %v97 = vld [vmem:[#allocation5 + $0x3c] sm:$0xf]
    %v98 = vlaneseq
    %v99 = vshrl.u32 %v98, 7
    %v100 = vsub.s32 0, %v99
    %v101 = vrot.slane %v81, %v100
    %v104 = vunpack.c.l.b16 %v74
    %v105 = vunpack.c.l.b16 %v75
    %v106 = vpack.c.b16 %v105, %v104
    %v124 = vunpack.c.l.b16 %v82
    %v125 = vunpack.c.l.b16 %v83
    %v126 = vunpack.c.l.b16 %v84
    %v127 = vunpack.c.l.b16 %v85
    %v128 = vunpack.c.l.b16 %v86
    %v129 = vunpack.c.l.b16 %v87
    %v130 = vunpack.c.l.b16 %v88
    %v131 = vunpack.c.l.b16 %v89
    %v132 = vunpack.c.l.b16 %v90
    %v133 = vunpack.c.l.b16 %v91
    %v134 = vunpack.c.l.b16 %v92
    %v135 = vunpack.c.l.b16 %v93
    %v136 = vunpack.c.l.b16 %v94
    %v137 = vunpack.c.l.b16 %v95
    %v138 = vunpack.c.l.b16 %v96
    %v139 = vunpack.c.l.b16 %v97
    %v140 = vpack.c.b16 %v125, %v124
    %v141 = vpack.c.b16 %v127, %v126
    %v142 = vpack.c.b16 %v129, %v128
    %v143 = vpack.c.b16 %v131, %v130
    %v144 = vpack.c.b16 %v133, %v132
    %v145 = vpack.c.b16 %v135, %v134
    %v146 = vpack.c.b16 %v137, %v136
    %v147 = vpack.c.b16 %v139, %v138
    %156 = vmatprep.subr.bf16.mxu0 0
    %157 = vmatpush1.bf16.msra.mxu0 %v140
    %158 = vmatprep.subr.bf16.mxu0 0
    %159 = vmatpush1.bf16.msra.mxu0 %v141
    %160 = vmatprep.subr.bf16.mxu0 0
    %161 = vmatpush1.bf16.msra.mxu0 %v142
    %162 = vmatprep.subr.bf16.mxu0 0
    %163 = vmatpush1.bf16.msra.mxu0 %v143
    %164 = vmatprep.subr.bf16.mxu0 0
    %165 = vmatpush1.bf16.msra.mxu0 %v144
    %166 = vmatprep.subr.bf16.mxu0 0
    %167 = vmatpush1.bf16.msra.mxu0 %v145
    %168 = vmatprep.subr.bf16.mxu0 0
    %169 = vmatpush1.bf16.msra.mxu0 %v146
    %170 = vmatprep.subr.bf16.mxu0 0
    %171 = vmatpush1.bf16.msra.mxu0 %v147
    %172 = vmatprep.subr.bf16.mxu0 0
    %173 = vmatpush1.bf16.msra.mxu0 0
    %174 = vmatprep.subr.bf16.mxu0 0
    %175 = vmatpush1.bf16.msra.mxu0 0
    %176 = vmatprep.subr.bf16.mxu0 0
    %177 = vmatpush1.bf16.msra.mxu0 0
    %178 = vmatprep.subr.bf16.mxu0 0
    %179 = vmatpush1.bf16.msra.mxu0 0
    %180 = vmatprep.subr.bf16.mxu0 0
    %181 = vmatpush1.bf16.msra.mxu0 0
    %182 = vmatprep.subr.bf16.mxu0 0
    %183 = vmatpush1.bf16.msra.mxu0 0
    %184 = vmatprep.subr.bf16.mxu0 0
    %185 = vmatpush1.bf16.msra.mxu0 0
    %186 = vmatprep.subr.bf16.mxu0 0
    %187 = vmatpush1.bf16.msra.mxu0 0
    %188 = vmatprep.mubr.bf16.mxu0 0
    %189 = vmatmul.mubr.bf16.gmra.mrb[0].mxu0 %v106
    %v190 = vpop.f32.mrb[0].mxu0
    %v191 = vadd.f32 %v101, %v190
    %v192 = vpop.f32.mrb[0].mxu0
    %v193 = vpop.f32.mrb[0].mxu0
    %v194 = vadd.f32 %v101, %v193
    %v195 = vpop.f32.mrb[0].mxu0
    %196 = vdwg.mxu0
    %197 = vadd.xlane.f32.xlu0 %v191
    %v198 = vpop.xlane.xlu0 %197
    %199 = vadd.xlane.f32.xlu0 %v194
    %v200 = vpop.xlane.xlu0 %199
    %v201 = vmul.f32 %v198, 0.03125
    %v202 = vmul.f32 %v200, 0.03125
    %v203 = vsub.f32 %v191, %v201
    %v204 = vsub.f32 %v194, %v202
    %v205 = vmul.f32 %v203, %v80
    %v206 = vmul.f32 %v204, %v80
    %v207 = vmul.f32 %v205, %v205
    %v208 = vmul.f32 %v206, %v206
    %209 = vadd.xlane.f32.xlu0 %v207
    %v210 = vpop.xlane.xlu0 %209
    %211 = vadd.xlane.f32.xlu0 %v208
    %v212 = vpop.xlane.xlu0 %211
    %v213 = vmul.f32 %v210, 0.03125
    %v214 = vmul.f32 %v212, 0.03125
    %v215 = vadd.f32 %v213, 1e-05
    %v216 = vadd.f32 %v214, 1e-05
    %v217 = vrsqrt.pop %v215
    %v218 = vrsqrt.pop %v216
    %v219 = vmul.f32 %v205, %v217
    %v220 = vmul.f32 %v206, %v218
    %v221 = vlaneseq
    %v222 = vshrl.u32 %v221, 7
    %v223 = vsub.s32 1, %v222
    %v224 = vrot.slane %v81, %v223
    %v225 = vmul.f32 %v219, %v224
    %v226 = vmul.f32 %v220, %v224
    %v227 = vlaneseq
    %v228 = vshrl.u32 %v227, 7
    %v229 = vsub.s32 2, %v228
    %v230 = vrot.slane %v81, %v229
    %v231 = vadd.f32 %v225, %v230
    %v232 = vadd.f32 %v226, %v230
    %v233 = vmul.f32 %v231, 0.5
    %v234 = vmul.f32 %v232, 0.5
    %v235 = vmul.f32 %v231, 0.044715
    %v236 = vmul.f32 %v232, 0.044715
    %v237 = vmul.f32 %v235, %v231
    %v238 = vmul.f32 %v236, %v232
    %v239 = vmul.f32 %v237, %v231
    %v240 = vmul.f32 %v238, %v232
    %v241 = vadd.f32 %v231, %v239
    %v242 = vadd.f32 %v232, %v240
    %v243 = vmul.f32 %v241, 0.7978846
    %v244 = vmul.f32 %v242, 0.7978846
    %v245 = vtanh.pop %v243
    %v246 = vtanh.pop %v244
    %v247 = vadd.f32 %v245, 1.0
    %v248 = vadd.f32 %v246, 1.0
    %v249 = vmul.f32 %v233, %v247
    %v250 = vmul.f32 %v234, %v248
    %v251 = vpack.c.bf16 %v250, %v249
    %v252 = vld [vmem:[#allocation7] sm:$0xf]
    %v253 = vld [vmem:[#allocation7 + $0x4] sm:$0xf]
    %v254 = vld [vmem:[#allocation7 + $0x8] sm:$0xf]
    %v255 = vld [vmem:[#allocation7 + $0xc] sm:$0xf]
    %v256 = vld [vmem:[#allocation7 + $0x10] sm:$0xf]
    %v257 = vld [vmem:[#allocation7 + $0x14] sm:$0xf]
    %v258 = vld [vmem:[#allocation7 + $0x18] sm:$0xf]
    %v259 = vld [vmem:[#allocation7 + $0x1c] sm:$0xf]
    %v260 = vld [vmem:[#allocation7 + $0x20] sm:$0xf]
    %v261 = vld [vmem:[#allocation7 + $0x24] sm:$0xf]
    %v262 = vld [vmem:[#allocation7 + $0x28] sm:$0xf]
    %v263 = vld [vmem:[#allocation7 + $0x2c] sm:$0xf]
    %v264 = vld [vmem:[#allocation7 + $0x30] sm:$0xf]
    %v265 = vld [vmem:[#allocation7 + $0x34] sm:$0xf]
    %v266 = vld [vmem:[#allocation7 + $0x38] sm:$0xf]
    %v267 = vld [vmem:[#allocation7 + $0x3c] sm:$0xf]
    %v268 = vlaneseq
    %v269 = vshrl.u32 %v268, 7
    %v270 = vsub.s32 3, %v269
    %v271 = vrot.slane %v81, %v270
    %v288 = vunpack.c.l.b16 %v252
    %v289 = vunpack.c.l.b16 %v253
    %v290 = vunpack.c.l.b16 %v254
    %v291 = vunpack.c.l.b16 %v255
    %v292 = vunpack.c.l.b16 %v256
    %v293 = vunpack.c.l.b16 %v257
    %v294 = vunpack.c.l.b16 %v258
    %v295 = vunpack.c.l.b16 %v259
    %v296 = vunpack.c.l.b16 %v260
    %v297 = vunpack.c.l.b16 %v261
    %v298 = vunpack.c.l.b16 %v262
    %v299 = vunpack.c.l.b16 %v263
    %v300 = vunpack.c.l.b16 %v264
    %v301 = vunpack.c.l.b16 %v265
    %v302 = vunpack.c.l.b16 %v266
    %v303 = vunpack.c.l.b16 %v267
    %v304 = vpack.c.b16 %v289, %v288
    %v305 = vpack.c.b16 %v291, %v290
    %v306 = vpack.c.b16 %v293, %v292
    %v307 = vpack.c.b16 %v295, %v294
    %v308 = vpack.c.b16 %v297, %v296
    %v309 = vpack.c.b16 %v299, %v298
    %v310 = vpack.c.b16 %v301, %v300
    %v311 = vpack.c.b16 %v303, %v302
    %320 = vmatprep.subr.bf16.mxu0 0
    %321 = vmatpush1.bf16.msra.mxu0 %v304
    %322 = vmatprep.subr.bf16.mxu0 0
    %323 = vmatpush1.bf16.msra.mxu0 %v305
    %324 = vmatprep.subr.bf16.mxu0 0
    %325 = vmatpush1.bf16.msra.mxu0 %v306
    %326 = vmatprep.subr.bf16.mxu0 0
    %327 = vmatpush1.bf16.msra.mxu0 %v307
    %328 = vmatprep.subr.bf16.mxu0 0
    %329 = vmatpush1.bf16.msra.mxu0 %v308
    %330 = vmatprep.subr.bf16.mxu0 0
    %331 = vmatpush1.bf16.msra.mxu0 %v309
    %332 = vmatprep.subr.bf16.mxu0 0
    %333 = vmatpush1.bf16.msra.mxu0 %v310
    %334 = vmatprep.subr.bf16.mxu0 0
    %335 = vmatpush1.bf16.msra.mxu0 %v311
    %336 = vmatprep.subr.bf16.mxu0 0
    %337 = vmatpush1.bf16.msra.mxu0 0
    %338 = vmatprep.subr.bf16.mxu0 0
    %339 = vmatpush1.bf16.msra.mxu0 0
    %340 = vmatprep.subr.bf16.mxu0 0
    %341 = vmatpush1.bf16.msra.mxu0 0
    %342 = vmatprep.subr.bf16.mxu0 0
    %343 = vmatpush1.bf16.msra.mxu0 0
    %344 = vmatprep.subr.bf16.mxu0 0
    %345 = vmatpush1.bf16.msra.mxu0 0
    %346 = vmatprep.subr.bf16.mxu0 0
    %347 = vmatpush1.bf16.msra.mxu0 0
    %348 = vmatprep.subr.bf16.mxu0 0
    %349 = vmatpush1.bf16.msra.mxu0 0
    %350 = vmatprep.subr.bf16.mxu0 0
    %351 = vmatpush1.bf16.msra.mxu0 0
    %352 = vmatprep.mubr.bf16.mxu0 0
    %353 = vmatmul.mubr.bf16.gmra.mrb[0].mxu0 %v251
    %v354 = vpop.f32.mrb[0].mxu0
    %v355 = vadd.f32 %v271, %v354
    %v356 = vpop.f32.mrb[0].mxu0
    %v357 = vpop.f32.mrb[0].mxu0
    %v358 = vadd.f32 %v271, %v357
    %v359 = vpop.f32.mrb[0].mxu0
    %360 = vdwg.mxu0
    %361 = vadd.xlane.f32.xlu0 %v355
    %v362 = vpop.xlane.xlu0 %361
    %363 = vadd.xlane.f32.xlu0 %v358
    %v364 = vpop.xlane.xlu0 %363
    %v365 = vmul.f32 %v362, 0.03125
    %v366 = vmul.f32 %v364, 0.03125
    %v367 = vsub.f32 %v355, %v365
    %v368 = vsub.f32 %v358, %v366
    %v369 = vmul.f32 %v367, %v80
    %v370 = vmul.f32 %v368, %v80
    %v371 = vmul.f32 %v369, %v369
    %v372 = vmul.f32 %v370, %v370
    %373 = vadd.xlane.f32.xlu0 %v371
    %v374 = vpop.xlane.xlu0 %373
    %375 = vadd.xlane.f32.xlu0 %v372
    %v376 = vpop.xlane.xlu0 %375
    %v377 = vmul.f32 %v374, 0.03125
    %v378 = vmul.f32 %v376, 0.03125
    %v379 = vadd.f32 %v377, 1e-05
    %v380 = vadd.f32 %v378, 1e-05
    %v381 = vrsqrt.pop %v379
    %v382 = vrsqrt.pop %v380
    %v383 = vmul.f32 %v369, %v381
    %v384 = vmul.f32 %v370, %v382
    %v385 = vlaneseq
    %v386 = vshrl.u32 %v385, 7
    %v387 = vsub.s32 4, %v386
    %v388 = vrot.slane %v81, %v387
    %v389 = vmul.f32 %v383, %v388
    %v390 = vmul.f32 %v384, %v388
    %v391 = vlaneseq
    %v392 = vshrl.u32 %v391, 7
    %v393 = vsub.s32 5, %v392
    %v394 = vrot.slane %v81, %v393
    %v395 = vadd.f32 %v389, %v394
    %v396 = vadd.f32 %v390, %v394
    %v397 = vmul.f32 %v395, 0.5
    %v398 = vmul.f32 %v396, 0.5
    %v399 = vmul.f32 %v395, 0.044715
    %v400 = vmul.f32 %v396, 0.044715
    %v401 = vmul.f32 %v399, %v395
    %v402 = vmul.f32 %v400, %v396
    %v403 = vmul.f32 %v401, %v395
    %v404 = vmul.f32 %v402, %v396
    %v405 = vadd.f32 %v395, %v403
    %v406 = vadd.f32 %v396, %v404
    %v407 = vmul.f32 %v405, 0.7978846
    %v408 = vmul.f32 %v406, 0.7978846
    %v409 = vtanh.pop %v407
    %v410 = vtanh.pop %v408
    %v411 = vadd.f32 %v409, 1.0
    %v412 = vadd.f32 %v410, 1.0
    %v413 = vmul.f32 %v397, %v411
    %v414 = vmul.f32 %v398, %v412
    %416 = vset.pattern.permute.xlu0 0
    %417 = vperm.xlu0 %416, %v81
    %v418 = vpop.permute.xlu0 %417
    %v419 = vrot.slane %v81, 6
    %v421 = vrot.slane %v418, 7
    %423 = vmatprep.subr.mxu0 0.0
    %424 = vmatpush1.xpose.msra.mxu0 %v413
    %425 = vmatprep.subr.mxu0 0.0
    %426 = vmatpush1.xpose.msra.mxu0 %v414
    %427 = vmatprep.subr.mxu0 0.0
    %428 = vmatpush1.xpose.msra.mxu0 0.0
    %429 = vmatprep.subr.mxu0 0.0
    %430 = vmatpush1.xpose.msra.mxu0 0.0
    %431 = vmatprep.subr.mxu0 0.0
    %432 = vmatpush1.xpose.msra.mxu0 0.0
    %433 = vmatprep.subr.mxu0 0.0
    %434 = vmatpush1.xpose.msra.mxu0 0.0
    %435 = vmatprep.subr.mxu0 0.0
    %436 = vmatpush1.xpose.msra.mxu0 0.0
    %437 = vmatprep.subr.mxu0 0.0
    %438 = vmatpush1.xpose.msra.mxu0 0.0
    %439 = vmatprep.subr.mxu0 0.0
    %440 = vmatpush1.xpose.msra.mxu0 0.0
    %441 = vmatprep.subr.mxu0 0.0
    %442 = vmatpush1.xpose.msra.mxu0 0.0
    %443 = vmatprep.subr.mxu0 0.0
    %444 = vmatpush1.xpose.msra.mxu0 0.0
    %445 = vmatprep.subr.mxu0 0.0
    %446 = vmatpush1.xpose.msra.mxu0 0.0
    %447 = vmatprep.subr.mxu0 0.0
    %448 = vmatpush1.xpose.msra.mxu0 0.0
    %449 = vmatprep.subr.mxu0 0.0
    %450 = vmatpush1.xpose.msra.mxu0 0.0
    %451 = vmatprep.subr.mxu0 0.0
    %452 = vmatpush1.xpose.msra.mxu0 0.0
    %453 = vmatprep.subr.mxu0 0.0
    %454 = vmatpush1.xpose.msra.mxu0 0.0
    %455 = vmatprep.subr.mxu0 0.0
    %456 = vmatpush1.xpose.msra.mxu0 0.0
    %457 = vmatprep.subr.mxu0 0.0
    %458 = vmatpush1.xpose.msra.mxu0 0.0
    %459 = vmatprep.subr.mxu0 0.0
    %460 = vmatpush1.xpose.msra.mxu0 0.0
    %461 = vmatprep.subr.mxu0 0.0
    %462 = vmatpush1.xpose.msra.mxu0 0.0
    %463 = vmatprep.subr.mxu0 0.0
    %464 = vmatpush1.xpose.msra.mxu0 0.0
    %465 = vmatprep.subr.mxu0 0.0
    %466 = vmatpush1.xpose.msra.mxu0 0.0
    %467 = vmatprep.subr.mxu0 0.0
    %468 = vmatpush1.xpose.msra.mxu0 0.0
    %469 = vmatprep.subr.mxu0 0.0
    %470 = vmatpush1.xpose.msra.mxu0 0.0
    %471 = vmatprep.subr.mxu0 0.0
    %472 = vmatpush1.xpose.msra.mxu0 0.0
    %473 = vmatprep.subr.mxu0 0.0
    %474 = vmatpush1.xpose.msra.mxu0 0.0
    %475 = vmatprep.subr.mxu0 0.0
    %476 = vmatpush1.xpose.msra.mxu0 0.0
    %477 = vmatprep.subr.mxu0 0.0
    %478 = vmatpush1.xpose.msra.mxu0 0.0
    %479 = vmatprep.subr.mxu0 0.0
    %480 = vmatpush1.xpose.msra.mxu0 0.0
    %481 = vmatprep.subr.mxu0 0.0
    %482 = vmatpush1.xpose.msra.mxu0 0.0
    %483 = vmatprep.subr.mxu0 0.0
    %484 = vmatpush1.xpose.msra.mxu0 0.0
    %485 = vmatprep.subr.mxu0 0.0
    %486 = vmatpush1.xpose.msra.mxu0 0.0
    %487 = vmatprep.mubr.f32.mxu0 0.0
    %488 = vmatmul.mubr.f32.gmra.mrb[0].mxu0 %v419
    %v489 = vpop.f32.mrb[0].mxu0
    %v490 = vadd.f32 %v421, %v489
    %v491 = vpop.f32.mrb[0].mxu0
    %492 = vdwg.mxu0
    %vm493 = vcmask 122880
    %494 = vst.msk [vmem:[#allocation10] sm:$0x1] %vm493, %v490
    %s495 = scalar_lea.vmem [#allocation8], 8
    %v496 = vld [vmem:[%s495] sm:$0xff]
    %s497 = scalar_lea.vmem [#allocation5], 64
    %v498 = vld [vmem:[%s497] sm:$0xf]
    %v499 = vld [vmem:[%s497 + $0x4] sm:$0xf]
    %v500 = vld [vmem:[%s497 + $0x8] sm:$0xf]
    %v501 = vld [vmem:[%s497 + $0xc] sm:$0xf]
    %v502 = vld [vmem:[%s497 + $0x10] sm:$0xf]
    %v503 = vld [vmem:[%s497 + $0x14] sm:$0xf]
    %v504 = vld [vmem:[%s497 + $0x18] sm:$0xf]
    %v505 = vld [vmem:[%s497 + $0x1c] sm:$0xf]
    %v506 = vld [vmem:[%s497 + $0x20] sm:$0xf]
    %v507 = vld [vmem:[%s497 + $0x24] sm:$0xf]
    %v508 = vld [vmem:[%s497 + $0x28] sm:$0xf]
    %v509 = vld [vmem:[%s497 + $0x2c] sm:$0xf]
    %v510 = vld [vmem:[%s497 + $0x30] sm:$0xf]
    %v511 = vld [vmem:[%s497 + $0x34] sm:$0xf]
    %v512 = vld [vmem:[%s497 + $0x38] sm:$0xf]
    %v513 = vld [vmem:[%s497 + $0x3c] sm:$0xf]
    %v514 = vlaneseq
    %v515 = vshrl.u32 %v514, 7
    %v516 = vsub.s32 0, %v515
    %v517 = vrot.slane %v496, %v516
    %v534 = vunpack.c.l.b16 %v498
    %v535 = vunpack.c.l.b16 %v499
    %v536 = vunpack.c.l.b16 %v500
    %v537 = vunpack.c.l.b16 %v501
    %v538 = vunpack.c.l.b16 %v502
    %v539 = vunpack.c.l.b16 %v503
    %v540 = vunpack.c.l.b16 %v504
    %v541 = vunpack.c.l.b16 %v505
    %v542 = vunpack.c.l.b16 %v506
    %v543 = vunpack.c.l.b16 %v507
    %v544 = vunpack.c.l.b16 %v508
    %v545 = vunpack.c.l.b16 %v509
    %v546 = vunpack.c.l.b16 %v510
    %v547 = vunpack.c.l.b16 %v511
    %v548 = vunpack.c.l.b16 %v512
    %v549 = vunpack.c.l.b16 %v513
    %v550 = vpack.c.b16 %v535, %v534
    %v551 = vpack.c.b16 %v537, %v536
    %v552 = vpack.c.b16 %v539, %v538
    %v553 = vpack.c.b16 %v541, %v540
    %v554 = vpack.c.b16 %v543, %v542
    %v555 = vpack.c.b16 %v545, %v544
    %v556 = vpack.c.b16 %v547, %v546
    %v557 = vpack.c.b16 %v549, %v548
    %566 = vmatprep.subr.bf16.mxu0 0
    %567 = vmatpush1.bf16.msra.mxu0 %v550
    %568 = vmatprep.subr.bf16.mxu0 0
    %569 = vmatpush1.bf16.msra.mxu0 %v551
    %570 = vmatprep.subr.bf16.mxu0 0
    %571 = vmatpush1.bf16.msra.mxu0 %v552
    %572 = vmatprep.subr.bf16.mxu0 0
    %573 = vmatpush1.bf16.msra.mxu0 %v553
    %574 = vmatprep.subr.bf16.mxu0 0
    %575 = vmatpush1.bf16.msra.mxu0 %v554
    %576 = vmatprep.subr.bf16.mxu0 0
    %577 = vmatpush1.bf16.msra.mxu0 %v555
    %578 = vmatprep.subr.bf16.mxu0 0
    %579 = vmatpush1.bf16.msra.mxu0 %v556
    %580 = vmatprep.subr.bf16.mxu0 0
    %581 = vmatpush1.bf16.msra.mxu0 %v557
    %582 = vmatprep.subr.bf16.mxu0 0
    %583 = vmatpush1.bf16.msra.mxu0 0
    %584 = vmatprep.subr.bf16.mxu0 0
    %585 = vmatpush1.bf16.msra.mxu0 0
    %586 = vmatprep.subr.bf16.mxu0 0
    %587 = vmatpush1.bf16.msra.mxu0 0
    %588 = vmatprep.subr.bf16.mxu0 0
    %589 = vmatpush1.bf16.msra.mxu0 0
    %590 = vmatprep.subr.bf16.mxu0 0
    %591 = vmatpush1.bf16.msra.mxu0 0
    %592 = vmatprep.subr.bf16.mxu0 0
    %593 = vmatpush1.bf16.msra.mxu0 0
    %594 = vmatprep.subr.bf16.mxu0 0
    %595 = vmatpush1.bf16.msra.mxu0 0
    %596 = vmatprep.subr.bf16.mxu0 0
    %597 = vmatpush1.bf16.msra.mxu0 0
    %598 = vmatprep.mubr.bf16.mxu0 0
    %599 = vmatmul.mubr.bf16.gmra.mrb[0].mxu0 %v106
    %v600 = vpop.f32.mrb[0].mxu0
    %v601 = vadd.f32 %v517, %v600
    %v602 = vpop.f32.mrb[0].mxu0
    %v603 = vpop.f32.mrb[0].mxu0
    %v604 = vadd.f32 %v517, %v603
    %v605 = vpop.f32.mrb[0].mxu0
    %606 = vdwg.mxu0
    %607 = vadd.xlane.f32.xlu0 %v601
    %v608 = vpop.xlane.xlu0 %607
    %609 = vadd.xlane.f32.xlu0 %v604
    %v610 = vpop.xlane.xlu0 %609
    %v611 = vmul.f32 %v608, 0.03125
    %v612 = vmul.f32 %v610, 0.03125
    %v613 = vsub.f32 %v601, %v611
    %v614 = vsub.f32 %v604, %v612
    %v615 = vmul.f32 %v613, %v80
    %v616 = vmul.f32 %v614, %v80
    %v617 = vmul.f32 %v615, %v615
    %v618 = vmul.f32 %v616, %v616
    %619 = vadd.xlane.f32.xlu0 %v617
    %v620 = vpop.xlane.xlu0 %619
    %621 = vadd.xlane.f32.xlu0 %v618
    %v622 = vpop.xlane.xlu0 %621
    %v623 = vmul.f32 %v620, 0.03125
    %v624 = vmul.f32 %v622, 0.03125
    %v625 = vadd.f32 %v623, 1e-05
    %v626 = vadd.f32 %v624, 1e-05
    %v627 = vrsqrt.pop %v625
    %v628 = vrsqrt.pop %v626
    %v629 = vmul.f32 %v615, %v627
    %v630 = vmul.f32 %v616, %v628
    %v631 = vlaneseq
    %v632 = vshrl.u32 %v631, 7
    %v633 = vsub.s32 1, %v632
    %v634 = vrot.slane %v496, %v633
    %v635 = vmul.f32 %v629, %v634
    %v636 = vmul.f32 %v630, %v634
    %v637 = vlaneseq
    %v638 = vshrl.u32 %v637, 7
    %v639 = vsub.s32 2, %v638
    %v640 = vrot.slane %v496, %v639
    %v641 = vadd.f32 %v635, %v640
    %v642 = vadd.f32 %v636, %v640
    %v643 = vmul.f32 %v641, 0.5
    %v644 = vmul.f32 %v642, 0.5
    %v645 = vmul.f32 %v641, 0.044715
    %v646 = vmul.f32 %v642, 0.044715
    %v647 = vmul.f32 %v645, %v641
    %v648 = vmul.f32 %v646, %v642
    %v649 = vmul.f32 %v647, %v641
    %v650 = vmul.f32 %v648, %v642
    %v651 = vadd.f32 %v641, %v649
    %v652 = vadd.f32 %v642, %v650
    %v653 = vmul.f32 %v651, 0.7978846
    %v654 = vmul.f32 %v652, 0.7978846
    %v655 = vtanh.pop %v653
    %v656 = vtanh.pop %v654
    %v657 = vadd.f32 %v655, 1.0
    %v658 = vadd.f32 %v656, 1.0
    %v659 = vmul.f32 %v643, %v657
    %v660 = vmul.f32 %v644, %v658
    %v661 = vpack.c.bf16 %v660, %v659
    %s662 = scalar_lea.vmem [#allocation7], 64
    %v663 = vld [vmem:[%s662] sm:$0xf]
    %v664 = vld [vmem:[%s662 + $0x4] sm:$0xf]
    %v665 = vld [vmem:[%s662 + $0x8] sm:$0xf]
    %v666 = vld [vmem:[%s662 + $0xc] sm:$0xf]
    %v667 = vld [vmem:[%s662 + $0x10] sm:$0xf]
    %v668 = vld [vmem:[%s662 + $0x14] sm:$0xf]
    %v669 = vld [vmem:[%s662 + $0x18] sm:$0xf]
    %v670 = vld [vmem:[%s662 + $0x1c] sm:$0xf]
    %v671 = vld [vmem:[%s662 + $0x20] sm:$0xf]
    %v672 = vld [vmem:[%s662 + $0x24] sm:$0xf]
    %v673 = vld [vmem:[%s662 + $0x28] sm:$0xf]
    %v674 = vld [vmem:[%s662 + $0x2c] sm:$0xf]
    %v675 = vld [vmem:[%s662 + $0x30] sm:$0xf]
    %v676 = vld [vmem:[%s662 + $0x34] sm:$0xf]
    %v677 = vld [vmem:[%s662 + $0x38] sm:$0xf]
    %v678 = vld [vmem:[%s662 + $0x3c] sm:$0xf]
    %v679 = vlaneseq
    %v680 = vshrl.u32 %v679, 7
    %v681 = vsub.s32 3, %v680
    %v682 = vrot.slane %v496, %v681
    %v699 = vunpack.c.l.b16 %v663
    %v700 = vunpack.c.l.b16 %v664
    %v701 = vunpack.c.l.b16 %v665
    %v702 = vunpack.c.l.b16 %v666
    %v703 = vunpack.c.l.b16 %v667
    %v704 = vunpack.c.l.b16 %v668
    %v705 = vunpack.c.l.b16 %v669
    %v706 = vunpack.c.l.b16 %v670
    %v707 = vunpack.c.l.b16 %v671
    %v708 = vunpack.c.l.b16 %v672
    %v709 = vunpack.c.l.b16 %v673
    %v710 = vunpack.c.l.b16 %v674
    %v711 = vunpack.c.l.b16 %v675
    %v712 = vunpack.c.l.b16 %v676
    %v713 = vunpack.c.l.b16 %v677
    %v714 = vunpack.c.l.b16 %v678
    %v715 = vpack.c.b16 %v700, %v699
    %v716 = vpack.c.b16 %v702, %v701
    %v717 = vpack.c.b16 %v704, %v703
    %v718 = vpack.c.b16 %v706, %v705
    %v719 = vpack.c.b16 %v708, %v707
    %v720 = vpack.c.b16 %v710, %v709
    %v721 = vpack.c.b16 %v712, %v711
    %v722 = vpack.c.b16 %v714, %v713
    %731 = vmatprep.subr.bf16.mxu0 0
    %732 = vmatpush1.bf16.msra.mxu0 %v715
    %733 = vmatprep.subr.bf16.mxu0 0
    %734 = vmatpush1.bf16.msra.mxu0 %v716
    %735 = vmatprep.subr.bf16.mxu0 0
    %736 = vmatpush1.bf16.msra.mxu0 %v717
    %737 = vmatprep.subr.bf16.mxu0 0
    %738 = vmatpush1.bf16.msra.mxu0 %v718
    %739 = vmatprep.subr.bf16.mxu0 0
    %740 = vmatpush1.bf16.msra.mxu0 %v719
    %741 = vmatprep.subr.bf16.mxu0 0
    %742 = vmatpush1.bf16.msra.mxu0 %v720
    %743 = vmatprep.subr.bf16.mxu0 0
    %744 = vmatpush1.bf16.msra.mxu0 %v721
    %745 = vmatprep.subr.bf16.mxu0 0
    %746 = vmatpush1.bf16.msra.mxu0 %v722
    %747 = vmatprep.subr.bf16.mxu0 0
    %748 = vmatpush1.bf16.msra.mxu0 0
    %749 = vmatprep.subr.bf16.mxu0 0
    %750 = vmatpush1.bf16.msra.mxu0 0
    %751 = vmatprep.subr.bf16.mxu0 0
    %752 = vmatpush1.bf16.msra.mxu0 0
    %753 = vmatprep.subr.bf16.mxu0 0
    %754 = vmatpush1.bf16.msra.mxu0 0
    %755 = vmatprep.subr.bf16.mxu0 0
    %756 = vmatpush1.bf16.msra.mxu0 0
    %757 = vmatprep.subr.bf16.mxu0 0
    %758 = vmatpush1.bf16.msra.mxu0 0
    %759 = vmatprep.subr.bf16.mxu0 0
    %760 = vmatpush1.bf16.msra.mxu0 0
    %761 = vmatprep.subr.bf16.mxu0 0
    %762 = vmatpush1.bf16.msra.mxu0 0
    %763 = vmatprep.mubr.bf16.mxu0 0
    %764 = vmatmul.mubr.bf16.gmra.mrb[0].mxu0 %v661
    %v765 = vpop.f32.mrb[0].mxu0
    %v766 = vadd.f32 %v682, %v765
    %v767 = vpop.f32.mrb[0].mxu0
    %v768 = vpop.f32.mrb[0].mxu0
    %v769 = vadd.f32 %v682, %v768
    %v770 = vpop.f32.mrb[0].mxu0
    %771 = vdwg.mxu0
    %772 = vadd.xlane.f32.xlu0 %v766
    %v773 = vpop.xlane.xlu0 %772
    %774 = vadd.xlane.f32.xlu0 %v769
    %v775 = vpop.xlane.xlu0 %774
    %v776 = vmul.f32 %v773, 0.03125
    %v777 = vmul.f32 %v775, 0.03125
    %v778 = vsub.f32 %v766, %v776
    %v779 = vsub.f32 %v769, %v777
    %v780 = vmul.f32 %v778, %v80
    %v781 = vmul.f32 %v779, %v80
    %v782 = vmul.f32 %v780, %v780
    %v783 = vmul.f32 %v781, %v781
    %784 = vadd.xlane.f32.xlu0 %v782
    %v785 = vpop.xlane.xlu0 %784
    %786 = vadd.xlane.f32.xlu0 %v783
    %v787 = vpop.xlane.xlu0 %786
    %v788 = vmul.f32 %v785, 0.03125
    %v789 = vmul.f32 %v787, 0.03125
    %v790 = vadd.f32 %v788, 1e-05
    %v791 = vadd.f32 %v789, 1e-05
    %v792 = vrsqrt.pop %v790
    %v793 = vrsqrt.pop %v791
    %v794 = vmul.f32 %v780, %v792
    %v795 = vmul.f32 %v781, %v793
    %v796 = vlaneseq
    %v797 = vshrl.u32 %v796, 7
    %v798 = vsub.s32 4, %v797
    %v799 = vrot.slane %v496, %v798
    %v800 = vmul.f32 %v794, %v799
    %v801 = vmul.f32 %v795, %v799
    %v802 = vlaneseq
    %v803 = vshrl.u32 %v802, 7
    %v804 = vsub.s32 5, %v803
    %v805 = vrot.slane %v496, %v804
    %v806 = vadd.f32 %v800, %v805
    %v807 = vadd.f32 %v801, %v805
    %v808 = vmul.f32 %v806, 0.5
    %v809 = vmul.f32 %v807, 0.5
    %v810 = vmul.f32 %v806, 0.044715
    %v811 = vmul.f32 %v807, 0.044715
    %v812 = vmul.f32 %v810, %v806
    %v813 = vmul.f32 %v811, %v807
    %v814 = vmul.f32 %v812, %v806
    %v815 = vmul.f32 %v813, %v807
    %v816 = vadd.f32 %v806, %v814
    %v817 = vadd.f32 %v807, %v815
    %v818 = vmul.f32 %v816, 0.7978846
    %v819 = vmul.f32 %v817, 0.7978846
    %v820 = vtanh.pop %v818
    %v821 = vtanh.pop %v819
    %v822 = vadd.f32 %v820, 1.0
    %v823 = vadd.f32 %v821, 1.0
    %v824 = vmul.f32 %v808, %v822
    %v825 = vmul.f32 %v809, %v823
    %827 = vset.pattern.permute.xlu0 0
    %828 = vperm.xlu0 %827, %v496
    %v829 = vpop.permute.xlu0 %828
    %v830 = vrot.slane %v496, 6
    %v832 = vrot.slane %v829, 7
    %834 = vmatprep.subr.mxu0 0.0
    %835 = vmatpush1.xpose.msra.mxu0 %v824
    %836 = vmatprep.subr.mxu0 0.0
    %837 = vmatpush1.xpose.msra.mxu0 %v825
    %838 = vmatprep.subr.mxu0 0.0
    %839 = vmatpush1.xpose.msra.mxu0 0.0
    %840 = vmatprep.subr.mxu0 0.0
    %841 = vmatpush1.xpose.msra.mxu0 0.0
    %842 = vmatprep.subr.mxu0 0.0
    %843 = vmatpush1.xpose.msra.mxu0 0.0
    %844 = vmatprep.subr.mxu0 0.0
    %845 = vmatpush1.xpose.msra.mxu0 0.0
    %846 = vmatprep.subr.mxu0 0.0
    %847 = vmatpush1.xpose.msra.mxu0 0.0
    %848 = vmatprep.subr.mxu0 0.0
    %849 = vmatpush1.xpose.msra.mxu0 0.0
    %850 = vmatprep.subr.mxu0 0.0
    %851 = vmatpush1.xpose.msra.mxu0 0.0
    %852 = vmatprep.subr.mxu0 0.0
    %853 = vmatpush1.xpose.msra.mxu0 0.0
    %854 = vmatprep.subr.mxu0 0.0
    %855 = vmatpush1.xpose.msra.mxu0 0.0
    %856 = vmatprep.subr.mxu0 0.0
    %857 = vmatpush1.xpose.msra.mxu0 0.0
    %858 = vmatprep.subr.mxu0 0.0
    %859 = vmatpush1.xpose.msra.mxu0 0.0
    %860 = vmatprep.subr.mxu0 0.0
    %861 = vmatpush1.xpose.msra.mxu0 0.0
    %862 = vmatprep.subr.mxu0 0.0
    %863 = vmatpush1.xpose.msra.mxu0 0.0
    %864 = vmatprep.subr.mxu0 0.0
    %865 = vmatpush1.xpose.msra.mxu0 0.0
    %866 = vmatprep.subr.mxu0 0.0
    %867 = vmatpush1.xpose.msra.mxu0 0.0
    %868 = vmatprep.subr.mxu0 0.0
    %869 = vmatpush1.xpose.msra.mxu0 0.0
    %870 = vmatprep.subr.mxu0 0.0
    %871 = vmatpush1.xpose.msra.mxu0 0.0
    %872 = vmatprep.subr.mxu0 0.0
    %873 = vmatpush1.xpose.msra.mxu0 0.0
    %874 = vmatprep.subr.mxu0 0.0
    %875 = vmatpush1.xpose.msra.mxu0 0.0
    %876 = vmatprep.subr.mxu0 0.0
    %877 = vmatpush1.xpose.msra.mxu0 0.0
    %878 = vmatprep.subr.mxu0 0.0
    %879 = vmatpush1.xpose.msra.mxu0 0.0
    %880 = vmatprep.subr.mxu0 0.0
    %881 = vmatpush1.xpose.msra.mxu0 0.0
    %882 = vmatprep.subr.mxu0 0.0
    %883 = vmatpush1.xpose.msra.mxu0 0.0
    %884 = vmatprep.subr.mxu0 0.0
    %885 = vmatpush1.xpose.msra.mxu0 0.0
    %886 = vmatprep.subr.mxu0 0.0
    %887 = vmatpush1.xpose.msra.mxu0 0.0
    %888 = vmatprep.subr.mxu0 0.0
    %889 = vmatpush1.xpose.msra.mxu0 0.0
    %890 = vmatprep.subr.mxu0 0.0
    %891 = vmatpush1.xpose.msra.mxu0 0.0
    %892 = vmatprep.subr.mxu0 0.0
    %893 = vmatpush1.xpose.msra.mxu0 0.0
    %894 = vmatprep.subr.mxu0 0.0
    %895 = vmatpush1.xpose.msra.mxu0 0.0
    %896 = vmatprep.subr.mxu0 0.0
    %897 = vmatpush1.xpose.msra.mxu0 0.0
    %898 = vmatprep.mubr.f32.mxu0 0.0
    %899 = vmatmul.mubr.f32.gmra.mrb[0].mxu0 %v830
    %v900 = vpop.f32.mrb[0].mxu0
    %v901 = vadd.f32 %v832, %v900
    %v902 = vpop.f32.mrb[0].mxu0
    %903 = vdwg.mxu0
    %904 = vst.msk [vmem:[#allocation10 + $0x1] sm:$0x1] %vm493, %v901
    // Predicated region
    $region34: #{tpu_custom_call.1} parent=1 // pred_check
      _
    $region35: #{tpu_custom_call.1} parent=1 // pred_check_branch
      %906 = sbr.rel (0) target = $region37
    $region36: #{tpu_custom_call.1} parent=1 // pred_region
      %s908 = ssub.s32 32, 32
      %909 = vsyncadd [#allocation4], %s908
      %s911 = sshll.u32 [#allocation10], 4
      %s912 = int_to_ptr.vmem [resolvable:$true] %s911
      %914 = dma.vmem_to_hbm [thread:$0]  %s912, 32, %s4, [#allocation4]
    $region37: #{tpu_custom_call.1} parent=1 // pred_fallthru
      _
    // Predicated region
    $region38: #{tpu_custom_call.1} parent=1 // pred_check
      _
    $region39: #{tpu_custom_call.1} parent=1 // pred_check_branch
      %916 = sbr.rel (0) target = $region41
    $region40: #{tpu_custom_call.1} parent=1 // pred_region
      %917 = dma.done [#allocation4], 32
    $region41: #{tpu_custom_call.1} parent=1 // pred_fallthru
      _
    %918 = vsyncpa [#allocation3], 1
    %919 = vsyncpa [#allocation6], 1
    %920 = vsyncpa [#allocation9], 1
    %921 = vsyncpa [#allocation4], 1

</llo_original>
